<compile_context>
chip_gen: v7x
topology: tpu7x:2x2x1
jax: 0.10.0
libtpu: 0.0.40
codegen_flags: <defaults>
</compile_context>

<pallas_src>
import jax
import jax.numpy as jnp
from jax.experimental import pallas as pl
from jax.experimental.pallas import tpu as pltpu


def _round_up(x, m):
    return ((x + m - 1) // m) * m


def _profiles_kernel(ct_ref, act_ref, out_ref):
    # ct_ref : (K, Pp)   c replicated over T (K = A*T), P zero-padded to 128-multiple
    # act_ref: (bt, K)   flattened actuator histories, lane-dense
    # out_ref: (bt, Pp)  lane-dense output slab
    out_ref[...] = jnp.dot(
        act_ref[...], ct_ref[...], preferred_element_type=jnp.float32
    ).astype(out_ref.dtype)


def profiles_from_actuators(c, input_profiles, input_actuators, input_parameters,
                            *, nprofiles, nx, btile=128,
                            vmem_limit_bytes=32 * 1024 * 1024):
    """c: (1, nprofiles*nx, nactuators); input_actuators: (B, nactuators, T)."""
    del input_profiles, input_parameters  # unused, matching the PyTorch forward
    B, A, T = input_actuators.shape
    P = nprofiles * nx
    K = A * T

    act_dtype = input_actuators.dtype          # bf16 accepted end-to-end; no f32 pre-cast
    act_bytes = jnp.dtype(act_dtype).itemsize

    # Zero-copy, lane-dense flatten of the dominant input: (B, A, T) -> (B, A*T).
    acts2d = input_actuators.reshape(B, K)

    # Pad P (lane axis of c^T and the output) to a multiple of 128, then fold the
    # T-sum into the contraction: ct_rep[a*T + t, p] = c[p, a].
    Pp = _round_up(P, 128)
    cT = jnp.transpose(c.reshape(P, A)).astype(jnp.float32)          # (A, P)
    if Pp != P:
        cT = jnp.concatenate([cT, jnp.zeros((A, Pp - P), jnp.float32)], axis=1)
    ct_rep = jnp.repeat(cT, T, axis=0)                                # (K, Pp)
    # TODO(synk): for very large A*T, tile K with a (bt, Pp) f32 VMEM accumulator
    # (trailing "arbitrary" grid axis) instead of one resident ct_rep block.

    # Batch tile: sublane-aligned, VMEM-budgeted, >= 2 parallel grid steps when
    # B allows (v7x megacore), and never relying on padding the B dim in HBM.
    if B <= 8:
        bt = B                                  # block equals the full batch dim
    else:
        bt = min(btile, _round_up(B, 8))
        bt = min(bt, _round_up(pl.cdiv(B, 2), 8))        # >= 2 grid steps for 2 TCs
        budget = int(0.75 * vmem_limit_bytes)
        fixed = 2 * K * Pp * 4                           # ct_rep block (conservative x2)
        per_row = 2 * (K * act_bytes + Pp * 4)           # double-buffered acts + out rows
        fit = max(8, (budget - fixed) // per_row)
        bt = max(8, min(bt, (fit // 8) * 8))

    grid = (pl.cdiv(B, bt),)

    cost = pl.CostEstimate(
        flops=2 * B * Pp * K,
        transcendentals=0,
        bytes_accessed=int(B * K * act_bytes + B * Pp * 4 + K * Pp * 4),
    )

    out_flat = pl.pallas_call(
        _profiles_kernel,
        out_shape=jax.ShapeDtypeStruct((B, Pp), jnp.float32),
        grid=grid,
        in_specs=[
            pl.BlockSpec((K, Pp), lambda i: (0, 0)),     # ct_rep, resident across steps
            pl.BlockSpec((bt, K), lambda i: (i, 0)),     # lane-dense actuator rows
        ],
        out_specs=pl.BlockSpec((bt, Pp), lambda i: (i, 0)),  # lane-dense output
        compiler_params=pltpu.CompilerParams(
            dimension_semantics=("parallel",),
            vmem_limit_bytes=vmem_limit_bytes),
        cost_estimate=cost,
    )(ct_rep, acts2d)

    return out_flat[:, :P].reshape(B, nprofiles, nx)


if __name__ == "__main__":
    # Small shapes consistent with the module
    nx = 16
    nprofiles = 4
    nactuators = 8
    batch = 2
    T = 8                     # actuator time steps
    n_params = 3              # unused by forward

    key = jax.random.PRNGKey(0)
    kc, kp, ka, kpar = jax.random.split(key, 4)

    # Deterministic "parameter" init (stand-in for torch.randn in __init__)
    c = jax.random.normal(kc, (1, nprofiles * nx, nactuators), dtype=jnp.float32)

    input_profiles = jax.random.normal(kp, (batch, nprofiles, nx), dtype=jnp.float32)
    input_actuators = jax.random.normal(ka, (batch, nactuators, T), dtype=jnp.float32)
    input_parameters = jax.random.normal(kpar, (batch, n_params), dtype=jnp.float32)

    out = profiles_from_actuators(
        c, input_profiles, input_actuators, input_parameters,
        nprofiles=nprofiles, nx=nx)
    out = jax.block_until_ready(out)

    # Pure-JAX reference check of the same semantics
    ref = jnp.einsum("pa,bat->bp",
                     c.reshape(nprofiles * nx, nactuators),
                     input_actuators,
                     precision=jax.lax.Precision.HIGHEST
                     ).reshape(batch, nprofiles, nx)
    assert out.shape == (batch, nprofiles, nx)
    assert jnp.allclose(out, ref, atol=1e-4, rtol=1e-4)

    print("KERNEL_OK")
</pallas_src>

<mosaic_0001>
module attributes {stable_mosaic.version = 11 : i64} {
  func.func @_profiles_kernel(%arg0: i32, %arg1: memref<64x128xf32, #tpu.memory_space<vmem>>, %arg2: memref<2x64xf32, #tpu.memory_space<vmem>>, %arg3: memref<2x128xf32, #tpu.memory_space<vmem>>) attributes {dimension_semantics = [#tpu.dimension_semantics<parallel>], iteration_bounds = array<i64: 1>, scalar_prefetch = 0 : i64, scratch_operands = 0 : i64, tpu.core_type = #tpu.core_type<tc>, window_params = [{pipeline_mode = #tpu.pipeline_mode<synchronous>, transform_indices = @transform_0, window_bounds = array<i64: 64, 128>}, {transform_indices = @transform_1, window_bounds = array<i64: 2, 64>}, {transform_indices = @transform_2, window_bounds = array<i64: 2, 128>}]} {
    %c0 = arith.constant 0 : index
    %c0_0 = arith.constant 0 : index
    %0 = vector.load %arg2[%c0, %c0_0] : memref<2x64xf32, #tpu.memory_space<vmem>>, vector<2x64xf32>
    %c0_1 = arith.constant 0 : index
    %c0_2 = arith.constant 0 : index
    %1 = vector.load %arg1[%c0_1, %c0_2] : memref<64x128xf32, #tpu.memory_space<vmem>>, vector<64x128xf32>
    %cst = arith.constant dense<0.000000e+00> : vector<2x128xf32>
    %2 = tpu.matmul %0, %1, %cst {dimension_numbers = #tpu.dot_dimension_numbers<[1], [0], [0], [1], [0, 0, 1, 1], [], []>} : vector<2x64xf32>, vector<64x128xf32>, vector<2x128xf32> -> vector<2x128xf32>
    %c0_3 = arith.constant 0 : index
    %c0_4 = arith.constant 0 : index
    %3 = vector.load %arg3[%c0_3, %c0_4] : memref<2x128xf32, #tpu.memory_space<vmem>>, vector<2x128xf32>
    tpu.vector_store %arg3[%c0_3, %c0_4], %2 {strides = array<i32>} : memref<2x128xf32, #tpu.memory_space<vmem>>, vector<2x128xf32>,
    return
  }
  func.func @transform_0(%arg0: i32) -> (i32, i32) {
    %c0_i32 = arith.constant 0 : i32
    %c0_i32_0 = arith.constant 0 : i32
    %c0_i32_1 = arith.constant 0 : i32
    return %c0_i32, %c0_i32_0 : i32, i32
  }
  func.func @transform_1(%arg0: i32) -> (i32, i32) {
    %c0_i32 = arith.constant 0 : i32
    %c0_i32_0 = arith.constant 0 : i32
    return %arg0, %c0_i32 : i32, i32
  }
  func.func @transform_2(%arg0: i32) -> (i32, i32) {
    %c0_i32 = arith.constant 0 : i32
    %c0_i32_0 = arith.constant 0 : i32
    return %arg0, %c0_i32 : i32, i32
  }
}

</mosaic_0001>

<llo_original>
// kernel: tpu_custom_call.1
$region0: #{tpu_custom_call.1}
  #allocation0 [shape = 'u32[]', space=smem, size = 0x4, offset = 0x4, fixed_abs, tag = 'smem constant byte address 0x4 - core index']
  #allocation1 [shape = 'u32[144,128]{1,0:T(1,128)}', space=vmem, size = 0x12000, scoped, tag = 'internal scratch']
  %s0 = inlined_call_operand.hbm [shape: f32[64,128], index: 0, kind: input, shape index: {}]
  %s1 = inlined_call_operand.vmem [shape: f32[2,64], index: 1, kind: input, shape index: {}]
  %s2 = inlined_call_operand.hbm [shape: f32[2,128], index: 2, kind: output, shape index: {}]
  %s3 = sld [smem:[#allocation0]]
  $region22: #{tpu_custom_call.1} parent=0
    _
  %s5 = ssub.s32 1, %s3
  %s6 = scalar_select 0, %s5, %s3
  $region1: #{tpu_custom_call.1} parent=0
    #allocation2 [shape = 'u8[32768]{0}', space=vmem, size = 0x8000, scoped, tag = 'input window, operand 0, single buffered']
    #allocation3 [shape = 's32[1]{0}', space=sflag, size = 0x4, scoped, tag = 'scoped memory for tpu_custom_call.1']
    #allocation4 [shape = 's32[1]{0}', space=sflag, size = 0x4, scoped, tag = 'scoped memory for tpu_custom_call.1']
    #allocation5 [shape = 'u8[1024]{0}', space=vmem, size = 0x400, scoped, tag = 'output window, operand 0, single buffered']
    %7 = vsyncpa [#allocation3], 0
    %8 = vsyncpa [#allocation4], 0
    // Predicated region
    $region2: #{tpu_custom_call.1} parent=1 // pred_check
      _
    $region3: #{tpu_custom_call.1} parent=1 // pred_check_branch
      %10 = sbr.rel (0) target = $region5
    $region4: #{tpu_custom_call.1} parent=1 // pred_region
      %s12 = ssub.s32 1024, 1024
      %13 = vsyncadd [#allocation3], %s12
      %s14 = sshll.u32 [#allocation2], 4
      %s15 = int_to_ptr.vmem [resolvable:$true] %s14
      %20 = dma.hbm_to_vmem [thread:$0]  %s0, 1024, %s15, [#allocation3], 128, 128, 8
    $region5: #{tpu_custom_call.1} parent=1 // pred_fallthru
      _
    // Predicated region
    $region6: #{tpu_custom_call.1} parent=1 // pred_check
      _
    $region7: #{tpu_custom_call.1} parent=1 // pred_check_branch
      %22 = sbr.rel (0) target = $region9
    $region8: #{tpu_custom_call.1} parent=1 // pred_region
      _
    $region9: #{tpu_custom_call.1} parent=1 // pred_fallthru
      _
    // Predicated region
    $region10: #{tpu_custom_call.1} parent=1 // pred_check
      _
    $region11: #{tpu_custom_call.1} parent=1 // pred_check_branch
      %24 = sbr.rel (0) target = $region13
    $region12: #{tpu_custom_call.1} parent=1 // pred_region
      %25 = dma.done [#allocation3], 1024
    $region13: #{tpu_custom_call.1} parent=1 // pred_fallthru
      _
    %v26 = vld [vmem:[%s1] sm:$0x3]
    %v27 = vld [vmem:[#allocation2] sm:$0xff]
    %v28 = vld [vmem:[#allocation2 + $0x8] sm:$0xff]
    %v29 = vld [vmem:[#allocation2 + $0x10] sm:$0xff]
    %v30 = vld [vmem:[#allocation2 + $0x18] sm:$0xff]
    %v31 = vld [vmem:[#allocation2 + $0x20] sm:$0xff]
    %v32 = vld [vmem:[#allocation2 + $0x28] sm:$0xff]
    %v33 = vld [vmem:[#allocation2 + $0x30] sm:$0xff]
    %v34 = vld [vmem:[#allocation2 + $0x38] sm:$0xff]
    %vm35 = vcmask 523264
    %v37 = vsel %vm35, %v26, 0
    %39 = vmatprep.subr.mxu0 0.0
    %40 = vmatpush1.msra.mxu0 %v27
    %41 = vmatprep.subr.mxu0 0.0
    %42 = vmatpush1.msra.mxu0 %v28
    %43 = vmatprep.subr.mxu0 0.0
    %44 = vmatpush1.msra.mxu0 %v29
    %45 = vmatprep.subr.mxu0 0.0
    %46 = vmatpush1.msra.mxu0 %v30
    %47 = vmatprep.subr.mxu0 0.0
    %48 = vmatpush1.msra.mxu0 %v31
    %49 = vmatprep.subr.mxu0 0.0
    %50 = vmatpush1.msra.mxu0 %v32
    %51 = vmatprep.subr.mxu0 0.0
    %52 = vmatpush1.msra.mxu0 %v33
    %53 = vmatprep.subr.mxu0 0.0
    %54 = vmatpush1.msra.mxu0 %v34
    %55 = vmatprep.subr.mxu0 0.0
    %56 = vmatpush1.msra.mxu0 0.0
    %57 = vmatprep.subr.mxu0 0.0
    %58 = vmatpush1.msra.mxu0 0.0
    %59 = vmatprep.subr.mxu0 0.0
    %60 = vmatpush1.msra.mxu0 0.0
    %61 = vmatprep.subr.mxu0 0.0
    %62 = vmatpush1.msra.mxu0 0.0
    %63 = vmatprep.subr.mxu0 0.0
    %64 = vmatpush1.msra.mxu0 0.0
    %65 = vmatprep.subr.mxu0 0.0
    %66 = vmatpush1.msra.mxu0 0.0
    %67 = vmatprep.subr.mxu0 0.0
    %68 = vmatpush1.msra.mxu0 0.0
    %69 = vmatprep.subr.mxu0 0.0
    %70 = vmatpush1.msra.mxu0 0.0
    %71 = vmatprep.subr.mxu0 0.0
    %72 = vmatpush1.msra.mxu0 0.0
    %73 = vmatprep.subr.mxu0 0.0
    %74 = vmatpush1.msra.mxu0 0.0
    %75 = vmatprep.subr.mxu0 0.0
    %76 = vmatpush1.msra.mxu0 0.0
    %77 = vmatprep.subr.mxu0 0.0
    %78 = vmatpush1.msra.mxu0 0.0
    %79 = vmatprep.subr.mxu0 0.0
    %80 = vmatpush1.msra.mxu0 0.0
    %81 = vmatprep.subr.mxu0 0.0
    %82 = vmatpush1.msra.mxu0 0.0
    %83 = vmatprep.subr.mxu0 0.0
    %84 = vmatpush1.msra.mxu0 0.0
    %85 = vmatprep.subr.mxu0 0.0
    %86 = vmatpush1.msra.mxu0 0.0
    %87 = vmatprep.subr.mxu0 0.0
    %88 = vmatpush1.msra.mxu0 0.0
    %89 = vmatprep.subr.mxu0 0.0
    %90 = vmatpush1.msra.mxu0 0.0
    %91 = vmatprep.subr.mxu0 0.0
    %92 = vmatpush1.msra.mxu0 0.0
    %93 = vmatprep.subr.mxu0 0.0
    %94 = vmatpush1.msra.mxu0 0.0
    %95 = vmatprep.subr.mxu0 0.0
    %96 = vmatpush1.msra.mxu0 0.0
    %97 = vmatprep.subr.mxu0 0.0
    %98 = vmatpush1.msra.mxu0 0.0
    %99 = vmatprep.subr.mxu0 0.0
    %100 = vmatpush1.msra.mxu0 0.0
    %101 = vmatprep.subr.mxu0 0.0
    %102 = vmatpush1.msra.mxu0 0.0
    %103 = vmatprep.mubr.f32.mxu0 0.0
    %104 = vmatmul.mubr.f32.gmra.mrb[0].mxu0 %v37
    %v105 = vpop.f32.mrb[0].mxu0
    %v106 = vadd.f32 0.0, %v105
    %v107 = vpop.f32.mrb[0].mxu0
    %108 = vdwg.mxu0
    %109 = vst [vmem:[#allocation5] sm:$0x3] %v106
    // Predicated region
    $region14: #{tpu_custom_call.1} parent=1 // pred_check
      _
    $region15: #{tpu_custom_call.1} parent=1 // pred_check_branch
      %111 = sbr.rel (0) target = $region17
    $region16: #{tpu_custom_call.1} parent=1 // pred_region
      %s113 = ssub.s32 32, 32
      %114 = vsyncadd [#allocation4], %s113
      %s116 = sshll.u32 [#allocation5], 4
      %s117 = int_to_ptr.vmem [resolvable:$true] %s116
      %119 = dma.vmem_to_hbm [thread:$0]  %s117, 32, %s2, [#allocation4]
    $region17: #{tpu_custom_call.1} parent=1 // pred_fallthru
      _
    // Predicated region
    $region18: #{tpu_custom_call.1} parent=1 // pred_check
      _
    $region19: #{tpu_custom_call.1} parent=1 // pred_check_branch
      %121 = sbr.rel (0) target = $region21
    $region20: #{tpu_custom_call.1} parent=1 // pred_region
      %122 = dma.done [#allocation4], 32
    $region21: #{tpu_custom_call.1} parent=1 // pred_fallthru
      _
    %123 = vsyncpa [#allocation3], 1
    %124 = vsyncpa [#allocation4], 1

</llo_original>
